<compile_context>
chip_gen: v7x
topology: tpu7x:2x2x1
jax: 0.10.0
libtpu: 0.0.40
codegen_flags: <defaults>
</compile_context>

<pallas_src>
import functools

import jax
import jax.numpy as jnp
from jax.experimental import pallas as pl
from jax.experimental.pallas import tpu as pltpu


def _mlp_kernel(x_ref,
                w1_ref, b1_ref,
                w2_ref, b2_ref,
                w3_ref, b3_ref,
                w4_ref, b4_ref,
                w5_ref, b5_ref,
                o_ref):
    def dense(h, w_ref, b_ref):
        # Cast only the MXU lhs operand to the weight dtype (no-op for f32,
        # bf16 for the optional low-precision path); accumulate in f32 and do
        # the bias add / activations in f32 (v5e VPU/EUP have no bf16 path).
        return jnp.dot(h.astype(w_ref.dtype), w_ref[...],
                       preferred_element_type=jnp.float32) + b_ref[...]

    h = x_ref[...]
    h = jnp.maximum(dense(h, w1_ref, b1_ref), 0.0)   # fc1 + relu
    h = jnp.maximum(dense(h, w2_ref, b2_ref), 0.0)   # fc2 + relu
    h = jnp.maximum(dense(h, w3_ref, b3_ref), 0.0)   # fc3 + relu
    h = jnp.maximum(dense(h, w4_ref, b4_ref), 0.0)   # fc4 + relu
    h = dense(h, w5_ref, b5_ref)                     # fc5
    # sigmoid = 1 / (1 + exp(-h)); exp and approx-reciprocal both go to the
    # EUP slot, so the epilogue costs ~nothing on the VALU.
    sig = pl.reciprocal(1.0 + jnp.exp(-h), approx=True)
    o_ref[...] = sig.astype(o_ref.dtype)


def _full_spec(shape):
    # Whole array resident; grid-invariant index map -> fetched once, not
    # re-DMA'd per batch step (weights/biases total < 100 KiB).
    return pl.BlockSpec(shape, lambda i: tuple(0 for _ in shape))


def _round_up(n, m):
    return ((n + m - 1) // m) * m


@functools.partial(jax.jit, static_argnames=("block_b", "use_bf16_inputs"))
def backtrack_fc_forward(x, params, block_b=1024, use_bf16_inputs=False):
    (w1, b1), (w2, b2), (w3, b3), (w4, b4), (w5, b5) = params
    B, D_in = x.shape
    D_out = w5.shape[1]
    out_dtype = x.dtype

    # Effective batch tile: as large as requested (sublane-aligned), but never
    # so large that the grid collapses below 2 steps -- v7x shards the
    # "parallel" batch axis across its 2 TensorCores.  VMEM is a non-issue:
    # even at bb=4096 the double-buffered x/out tiles are ~1.2 MiB.
    bb = min(_round_up(block_b, 8), max(8, _round_up(-(-B // 2), 8)))
    B_pad = _round_up(B, bb)
    if B_pad != B:
        x = jnp.pad(x, ((0, B_pad - B), (0, 0)))

    if use_bf16_inputs:
        # Halve the dominant HBM read (x) and the weight bytes; biases stay
        # f32 and accumulation is f32 inside the kernel.
        x_in = x.astype(jnp.bfloat16)
        weights = [w.astype(jnp.bfloat16) for w in (w1, w2, w3, w4, w5)]
    else:
        x_in = x
        weights = [w1, w2, w3, w4, w5]
    biases = [b1, b2, b3, b4, b5]

    in_specs = [pl.BlockSpec((bb, D_in), lambda i: (i, 0))]
    operands = [x_in]
    for w, b in zip(weights, biases):
        in_specs.append(_full_spec(w.shape))
        in_specs.append(_full_spec(b.shape))
        operands.append(w)
        operands.append(b)

    out = pl.pallas_call(
        _mlp_kernel,
        out_shape=jax.ShapeDtypeStruct((B_pad, D_out), out_dtype),
        grid_spec=pltpu.PrefetchScalarGridSpec(
            num_scalar_prefetch=0,
            grid=(B_pad // bb,),
            in_specs=in_specs,
            out_specs=pl.BlockSpec((bb, D_out), lambda i: (i, 0)),
        ),
        compiler_params=pltpu.CompilerParams(
            dimension_semantics=("parallel",)),
    )(*operands)

    return out[:B] if B_pad != B else out


def init_params(key, input_dim, output_dim):
    """Deterministic init mimicking PyTorch nn.Linear default (uniform +-1/sqrt(fan_in)).

    Weights are stored as (in_features, out_features)."""
    dims = [(input_dim, 60), (60, 30), (30, 15), (15, 5), (5, output_dim)]
    params = []
    for d_in, d_out in dims:
        key, kw, kb = jax.random.split(key, 3)
        bound = 1.0 / jnp.sqrt(float(d_in))
        w = jax.random.uniform(kw, (d_in, d_out), jnp.float32, -bound, bound)
        b = jax.random.uniform(kb, (1, d_out), jnp.float32, -bound, bound)
        params.append((w, b))
    return params


def reference_forward(x, params):
    h = x
    for i, (w, b) in enumerate(params):
        h = h @ w + b
        if i < len(params) - 1:
            h = jnp.maximum(h, 0.0)
        else:
            h = jax.nn.sigmoid(h)
    return h


if __name__ == "__main__":
    key = jax.random.PRNGKey(0)
    k_x, k_x2, k_p = jax.random.split(key, 3)

    input_dim, output_dim = 32, 4
    params = init_params(k_p, input_dim, output_dim)

    # Case 1: batch divisible by the (capped) tile.
    batch = 16
    x = jax.random.normal(k_x, (batch, input_dim), jnp.float32)
    out = jax.block_until_ready(backtrack_fc_forward(x, params))
    ref = reference_forward(x, params)
    assert out.shape == (batch, output_dim)
    # Tolerance accounts for the approx (EUP) reciprocal in the sigmoid.
    assert jnp.allclose(out, ref, atol=2e-3, rtol=2e-3), (
        f"max abs err {jnp.max(jnp.abs(out - ref))}")

    # Case 2: ragged batch -> exercises the wrapper-side pad/slice path.
    batch2 = 19
    x2 = jax.random.normal(k_x2, (batch2, input_dim), jnp.float32)
    out2 = jax.block_until_ready(backtrack_fc_forward(x2, params))
    ref2 = reference_forward(x2, params)
    assert out2.shape == (batch2, output_dim)
    assert jnp.allclose(out2, ref2, atol=2e-3, rtol=2e-3), (
        f"max abs err {jnp.max(jnp.abs(out2 - ref2))}")

    print("KERNEL_OK")
</pallas_src>

<mosaic_0001>
module attributes {stable_mosaic.version = 11 : i64} {
  func.func @_mlp_kernel(%arg0: i32, %arg1: memref<8x32xf32, #tpu.memory_space<vmem>>, %arg2: memref<32x60xf32, #tpu.memory_space<vmem>>, %arg3: memref<1x60xf32, #tpu.memory_space<vmem>>, %arg4: memref<60x30xf32, #tpu.memory_space<vmem>>, %arg5: memref<1x30xf32, #tpu.memory_space<vmem>>, %arg6: memref<30x15xf32, #tpu.memory_space<vmem>>, %arg7: memref<1x15xf32, #tpu.memory_space<vmem>>, %arg8: memref<15x5xf32, #tpu.memory_space<vmem>>, %arg9: memref<1x5xf32, #tpu.memory_space<vmem>>, %arg10: memref<5x4xf32, #tpu.memory_space<vmem>>, %arg11: memref<1x4xf32, #tpu.memory_space<vmem>>, %arg12: memref<8x4xf32, #tpu.memory_space<vmem>>) attributes {dimension_semantics = [#tpu.dimension_semantics<parallel>], iteration_bounds = array<i64: 2>, scalar_prefetch = 0 : i64, scratch_operands = 0 : i64, tpu.core_type = #tpu.core_type<tc>, window_params = [{transform_indices = @transform_0, window_bounds = array<i64: 8, 32>}, {pipeline_mode = #tpu.pipeline_mode<synchronous>, transform_indices = @transform_1, window_bounds = array<i64: 32, 60>}, {pipeline_mode = #tpu.pipeline_mode<synchronous>, transform_indices = @transform_2, window_bounds = array<i64: 1, 60>}, {pipeline_mode = #tpu.pipeline_mode<synchronous>, transform_indices = @transform_3, window_bounds = array<i64: 60, 30>}, {pipeline_mode = #tpu.pipeline_mode<synchronous>, transform_indices = @transform_4, window_bounds = array<i64: 1, 30>}, {pipeline_mode = #tpu.pipeline_mode<synchronous>, transform_indices = @transform_5, window_bounds = array<i64: 30, 15>}, {pipeline_mode = #tpu.pipeline_mode<synchronous>, transform_indices = @transform_6, window_bounds = array<i64: 1, 15>}, {pipeline_mode = #tpu.pipeline_mode<synchronous>, transform_indices = @transform_7, window_bounds = array<i64: 15, 5>}, {pipeline_mode = #tpu.pipeline_mode<synchronous>, transform_indices = @transform_8, window_bounds = array<i64: 1, 5>}, {pipeline_mode = #tpu.pipeline_mode<synchronous>, transform_indices = @transform_9, window_bounds = array<i64: 5, 4>}, {pipeline_mode = #tpu.pipeline_mode<synchronous>, transform_indices = @transform_10, window_bounds = array<i64: 1, 4>}, {transform_indices = @transform_11, window_bounds = array<i64: 8, 4>}]} {
    %c0 = arith.constant 0 : index
    %c0_0 = arith.constant 0 : index
    %0 = vector.load %arg1[%c0, %c0_0] : memref<8x32xf32, #tpu.memory_space<vmem>>, vector<8x32xf32>
    %c0_1 = arith.constant 0 : index
    %c0_2 = arith.constant 0 : index
    %1 = vector.load %arg2[%c0_1, %c0_2] : memref<32x60xf32, #tpu.memory_space<vmem>>, vector<32x60xf32>
    %cst = arith.constant dense<0.000000e+00> : vector<8x60xf32>
    %2 = tpu.matmul %0, %1, %cst {dimension_numbers = #tpu.dot_dimension_numbers<[1], [0], [0], [1], [0, 0, 1, 1], [], []>} : vector<8x32xf32>, vector<32x60xf32>, vector<8x60xf32> -> vector<8x60xf32>
    %c0_3 = arith.constant 0 : index
    %c0_4 = arith.constant 0 : index
    %3 = vector.load %arg3[%c0_3, %c0_4] : memref<1x60xf32, #tpu.memory_space<vmem>>, vector<1x60xf32>
    %4 = vector.broadcast %3 : vector<1x60xf32> to vector<8x60xf32>
    %5 = arith.addf %2, %4 : vector<8x60xf32>
    %cst_5 = arith.constant 0.000000e+00 : f32
    %6 = vector.broadcast %cst_5 : f32 to vector<8x60xf32>
    %7 = arith.maximumf %5, %6 : vector<8x60xf32>
    %c0_6 = arith.constant 0 : index
    %c0_7 = arith.constant 0 : index
    %8 = vector.load %arg4[%c0_6, %c0_7] : memref<60x30xf32, #tpu.memory_space<vmem>>, vector<60x30xf32>
    %cst_8 = arith.constant dense<0.000000e+00> : vector<8x30xf32>
    %9 = tpu.matmul %7, %8, %cst_8 {dimension_numbers = #tpu.dot_dimension_numbers<[1], [0], [0], [1], [0, 0, 1, 1], [], []>} : vector<8x60xf32>, vector<60x30xf32>, vector<8x30xf32> -> vector<8x30xf32>
    %c0_9 = arith.constant 0 : index
    %c0_10 = arith.constant 0 : index
    %10 = vector.load %arg5[%c0_9, %c0_10] : memref<1x30xf32, #tpu.memory_space<vmem>>, vector<1x30xf32>
    %11 = vector.broadcast %10 : vector<1x30xf32> to vector<8x30xf32>
    %12 = arith.addf %9, %11 : vector<8x30xf32>
    %cst_11 = arith.constant 0.000000e+00 : f32
    %13 = vector.broadcast %cst_11 : f32 to vector<8x30xf32>
    %14 = arith.maximumf %12, %13 : vector<8x30xf32>
    %c0_12 = arith.constant 0 : index
    %c0_13 = arith.constant 0 : index
    %15 = vector.load %arg6[%c0_12, %c0_13] : memref<30x15xf32, #tpu.memory_space<vmem>>, vector<30x15xf32>
    %cst_14 = arith.constant dense<0.000000e+00> : vector<8x15xf32>
    %16 = tpu.matmul %14, %15, %cst_14 {dimension_numbers = #tpu.dot_dimension_numbers<[1], [0], [0], [1], [0, 0, 1, 1], [], []>} : vector<8x30xf32>, vector<30x15xf32>, vector<8x15xf32> -> vector<8x15xf32>
    %c0_15 = arith.constant 0 : index
    %c0_16 = arith.constant 0 : index
    %17 = vector.load %arg7[%c0_15, %c0_16] : memref<1x15xf32, #tpu.memory_space<vmem>>, vector<1x15xf32>
    %18 = vector.broadcast %17 : vector<1x15xf32> to vector<8x15xf32>
    %19 = arith.addf %16, %18 : vector<8x15xf32>
    %cst_17 = arith.constant 0.000000e+00 : f32
    %20 = vector.broadcast %cst_17 : f32 to vector<8x15xf32>
    %21 = arith.maximumf %19, %20 : vector<8x15xf32>
    %c0_18 = arith.constant 0 : index
    %c0_19 = arith.constant 0 : index
    %22 = vector.load %arg8[%c0_18, %c0_19] : memref<15x5xf32, #tpu.memory_space<vmem>>, vector<15x5xf32>
    %cst_20 = arith.constant dense<0.000000e+00> : vector<8x5xf32>
    %23 = tpu.matmul %21, %22, %cst_20 {dimension_numbers = #tpu.dot_dimension_numbers<[1], [0], [0], [1], [0, 0, 1, 1], [], []>} : vector<8x15xf32>, vector<15x5xf32>, vector<8x5xf32> -> vector<8x5xf32>
    %c0_21 = arith.constant 0 : index
    %c0_22 = arith.constant 0 : index
    %24 = vector.load %arg9[%c0_21, %c0_22] : memref<1x5xf32, #tpu.memory_space<vmem>>, vector<1x5xf32>
    %25 = vector.broadcast %24 : vector<1x5xf32> to vector<8x5xf32>
    %26 = arith.addf %23, %25 : vector<8x5xf32>
    %cst_23 = arith.constant 0.000000e+00 : f32
    %27 = vector.broadcast %cst_23 : f32 to vector<8x5xf32>
    %28 = arith.maximumf %26, %27 : vector<8x5xf32>
    %c0_24 = arith.constant 0 : index
    %c0_25 = arith.constant 0 : index
    %29 = vector.load %arg10[%c0_24, %c0_25] : memref<5x4xf32, #tpu.memory_space<vmem>>, vector<5x4xf32>
    %cst_26 = arith.constant dense<0.000000e+00> : vector<8x4xf32>
    %30 = tpu.matmul %28, %29, %cst_26 {dimension_numbers = #tpu.dot_dimension_numbers<[1], [0], [0], [1], [0, 0, 1, 1], [], []>} : vector<8x5xf32>, vector<5x4xf32>, vector<8x4xf32> -> vector<8x4xf32>
    %c0_27 = arith.constant 0 : index
    %c0_28 = arith.constant 0 : index
    %31 = vector.load %arg11[%c0_27, %c0_28] : memref<1x4xf32, #tpu.memory_space<vmem>>, vector<1x4xf32>
    %32 = vector.broadcast %31 : vector<1x4xf32> to vector<8x4xf32>
    %33 = arith.addf %30, %32 : vector<8x4xf32>
    %cst_29 = arith.constant 0.000000e+00 : f32
    %34 = vector.broadcast %cst_29 : f32 to vector<8x4xf32>
    %35 = arith.subf %34, %33 : vector<8x4xf32>
    %36 = math.exp %35 : vector<8x4xf32>
    %cst_30 = arith.constant 1.000000e+00 : f32
    %37 = vector.broadcast %cst_30 : f32 to vector<8x4xf32>
    %38 = arith.addf %37, %36 : vector<8x4xf32>
    %39 = tpu.reciprocal %38 {approx = true} : vector<8x4xf32> -> vector<8x4xf32>
    %c0_31 = arith.constant 0 : index
    %c0_32 = arith.constant 0 : index
    %40 = vector.load %arg12[%c0_31, %c0_32] : memref<8x4xf32, #tpu.memory_space<vmem>>, vector<8x4xf32>
    tpu.vector_store %arg12[%c0_31, %c0_32], %39 {strides = array<i32>} : memref<8x4xf32, #tpu.memory_space<vmem>>, vector<8x4xf32>,
    return
  }
  func.func @transform_0(%arg0: i32) -> (i32, i32) {
    %c0_i32 = arith.constant 0 : i32
    %c0_i32_0 = arith.constant 0 : i32
    return %arg0, %c0_i32 : i32, i32
  }
  func.func @transform_1(%arg0: i32) -> (i32, i32) {
    %c0_i32 = arith.constant 0 : i32
    %c0_i32_0 = arith.constant 0 : i32
    %c0_i32_1 = arith.constant 0 : i32
    return %c0_i32, %c0_i32_0 : i32, i32
  }
  func.func @transform_2(%arg0: i32) -> (i32, i32) {
    %c0_i32 = arith.constant 0 : i32
    %c0_i32_0 = arith.constant 0 : i32
    %c0_i32_1 = arith.constant 0 : i32
    return %c0_i32, %c0_i32_0 : i32, i32
  }
  func.func @transform_3(%arg0: i32) -> (i32, i32) {
    %c0_i32 = arith.constant 0 : i32
    %c0_i32_0 = arith.constant 0 : i32
    %c0_i32_1 = arith.constant 0 : i32
    return %c0_i32, %c0_i32_0 : i32, i32
  }
  func.func @transform_4(%arg0: i32) -> (i32, i32) {
    %c0_i32 = arith.constant 0 : i32
    %c0_i32_0 = arith.constant 0 : i32
    %c0_i32_1 = arith.constant 0 : i32
    return %c0_i32, %c0_i32_0 : i32, i32
  }
  func.func @transform_5(%arg0: i32) -> (i32, i32) {
    %c0_i32 = arith.constant 0 : i32
    %c0_i32_0 = arith.constant 0 : i32
    %c0_i32_1 = arith.constant 0 : i32
    return %c0_i32, %c0_i32_0 : i32, i32
  }
  func.func @transform_6(%arg0: i32) -> (i32, i32) {
    %c0_i32 = arith.constant 0 : i32
    %c0_i32_0 = arith.constant 0 : i32
    %c0_i32_1 = arith.constant 0 : i32
    return %c0_i32, %c0_i32_0 : i32, i32
  }
  func.func @transform_7(%arg0: i32) -> (i32, i32) {
    %c0_i32 = arith.constant 0 : i32
    %c0_i32_0 = arith.constant 0 : i32
    %c0_i32_1 = arith.constant 0 : i32
    return %c0_i32, %c0_i32_0 : i32, i32
  }
  func.func @transform_8(%arg0: i32) -> (i32, i32) {
    %c0_i32 = arith.constant 0 : i32
    %c0_i32_0 = arith.constant 0 : i32
    %c0_i32_1 = arith.constant 0 : i32
    return %c0_i32, %c0_i32_0 : i32, i32
  }
  func.func @transform_9(%arg0: i32) -> (i32, i32) {
    %c0_i32 = arith.constant 0 : i32
    %c0_i32_0 = arith.constant 0 : i32
    %c0_i32_1 = arith.constant 0 : i32
    return %c0_i32, %c0_i32_0 : i32, i32
  }
  func.func @transform_10(%arg0: i32) -> (i32, i32) {
    %c0_i32 = arith.constant 0 : i32
    %c0_i32_0 = arith.constant 0 : i32
    %c0_i32_1 = arith.constant 0 : i32
    return %c0_i32, %c0_i32_0 : i32, i32
  }
  func.func @transform_11(%arg0: i32) -> (i32, i32) {
    %c0_i32 = arith.constant 0 : i32
    %c0_i32_0 = arith.constant 0 : i32
    return %arg0, %c0_i32 : i32, i32
  }
}

</mosaic_0001>

<llo_original>
// kernel: backtrack_fc_forward.1
$region0: #{backtrack_fc_forward.1}
  #allocation0 [shape = 'u32[]', space=smem, size = 0x4, offset = 0x4, fixed_abs, tag = 'smem constant byte address 0x4 - core index']
  #allocation1 [shape = 'u32[144,128]{1,0:T(1,128)}', space=vmem, size = 0x12000, scoped, tag = 'internal scratch']
  %s0 = inlined_call_operand.vmem [shape: f32[16,32], index: 0, kind: input, shape index: {}]
  %s1 = inlined_call_operand.vmem [shape: f32[32,60], index: 1, kind: input, shape index: {}]
  %s2 = inlined_call_operand.vmem [shape: f32[1,60], index: 2, kind: input, shape index: {}]
  %s3 = inlined_call_operand.vmem [shape: f32[60,30], index: 3, kind: input, shape index: {}]
  %s4 = inlined_call_operand.vmem [shape: f32[1,30], index: 4, kind: input, shape index: {}]
  %s5 = inlined_call_operand.vmem [shape: f32[30,15], index: 5, kind: input, shape index: {}]
  %s6 = inlined_call_operand.vmem [shape: f32[1,15], index: 6, kind: input, shape index: {}]
  %s7 = inlined_call_operand.vmem [shape: f32[15,5], index: 7, kind: input, shape index: {}]
  %s8 = inlined_call_operand.vmem [shape: f32[1,5], index: 8, kind: input, shape index: {}]
  %s9 = inlined_call_operand.vmem [shape: f32[5,4], index: 9, kind: input, shape index: {}]
  %s10 = inlined_call_operand.vmem [shape: f32[1,4], index: 10, kind: input, shape index: {}]
  %s11 = inlined_call_operand.vmem [shape: f32[16,4], index: 11, kind: output, shape index: {}]
  %s12 = sld [smem:[#allocation0]]
  $region77: #{backtrack_fc_forward.1} parent=0
    _
  %s14 = ssub.s32 1, %s12
  %s15 = scalar_select 0, %s14, %s12
  loop: start=0, step=1, limit=4
  $region2: #{backtrack_fc_forward.1} parent=0 // loop_pre_header
    _
  $region3: #{backtrack_fc_forward.1} parent=0 // loop_header
    %s17 = sphi 0, %s21
    %p18 = scmp.ge.s32.totalorder %s17, 4
    %s27 = sphi 0, %s29
    %s30 = sphi 0, %s27
    %s31 = sphi 0, %s30
    %s47 = sphi 0, %s31
    %s51 = sphi 0, %s51
    %s53 = sphi 0, %s51
    %s54 = sphi 0, %s53
    %s68 = sphi 0, %s54
    %s72 = sphi 0, %s72
    %s74 = sphi 0, %s72
    %s75 = sphi 0, %s74
    %s89 = sphi 0, %s75
    %s93 = sphi 0, %s93
    %s95 = sphi 0, %s93
    %s96 = sphi 0, %s95
    %s110 = sphi 0, %s96
    %s114 = sphi 0, %s114
    %s116 = sphi 0, %s114
    %s117 = sphi 0, %s116
    %s131 = sphi 0, %s117
    %s135 = sphi 0, %s135
    %s137 = sphi 0, %s135
    %s138 = sphi 0, %s137
    %s152 = sphi 0, %s138
    %s156 = sphi 0, %s156
    %s158 = sphi 0, %s156
    %s159 = sphi 0, %s158
    %s173 = sphi 0, %s159
    %s177 = sphi 0, %s177
    %s179 = sphi 0, %s177
    %s180 = sphi 0, %s179
    %s194 = sphi 0, %s180
    %s198 = sphi 0, %s198
    %s200 = sphi 0, %s198
    %s201 = sphi 0, %s200
    %s215 = sphi 0, %s201
    %s219 = sphi 0, %s219
    %s221 = sphi 0, %s219
    %s222 = sphi 0, %s221
    %s236 = sphi 0, %s222
    %s240 = sphi 0, %s240
    %s242 = sphi 0, %s240
    %s243 = sphi 0, %s242
    %s257 = sphi 0, %s243
    %s263 = sphi 0, %s265
    %s266 = sphi 0, %s263
    %s267 = sphi 0, %s266
    %s283 = sphi 0, %s267
  $region4: #{backtrack_fc_forward.1} parent=0 // loop_header_branch
    %20 = sbr.rel (%p18) target = $region8
  $region5: #{backtrack_fc_forward.1} parent=0 // loop_body
    %s22 = ssub.s32 %s17, 1
    %s23 = ssub.s32 %s17, 2
    %s24 = sadd.s32 %s17, 1
    %s25 = ssub.s32 %s17, %s24
    %p26 = scmp.eq.s32.totalorder %s25, 0
    %s28 = sadd.s32 %s27, 1
    %s29 = scalar_select %p26, %s27, %s28
    %p32 = pneg %p26
    %p33 = scmp.eq.s32.totalorder %s17, 1
    %p34 = por %p32, %p33
    %p35 = scmp.ne.s32.totalorder %s27, %s30
    %p36 = scmp.eq.s32.totalorder %s17, 0
    %p37 = por %p35, %p36
    %p38 = scmp.ne.s32.totalorder %s27, %s30
    %p39 = scmp.eq.s32.totalorder %s22, 1
    %p40 = por %p38, %p39
    %p41 = scmp.ne.s32.totalorder %s30, %s31
    %p42 = scmp.eq.s32.totalorder %s22, 0
    %p43 = por %p41, %p42
    %p44 = scmp.ne.s32.totalorder %s30, %s31
    %p45 = scmp.eq.s32.totalorder %s23, 1
    %p46 = por %p44, %p45
    %p48 = scmp.ne.s32.totalorder %s31, %s47
    %p49 = scmp.eq.s32.totalorder %s23, 0
    %p50 = por %p48, %p49
    %s52 = sadd.s32 %s51, 1
    %p55 = scmp.eq.s32.totalorder %s17, 1
    %p56 = scmp.ne.s32.totalorder %s51, %s53
    %p57 = scmp.eq.s32.totalorder %s17, 0
    %p58 = por %p56, %p57
    %p59 = scmp.ne.s32.totalorder %s51, %s53
    %p60 = scmp.eq.s32.totalorder %s22, 1
    %p61 = por %p59, %p60
    %p62 = scmp.ne.s32.totalorder %s53, %s54
    %p63 = scmp.eq.s32.totalorder %s22, 0
    %p64 = por %p62, %p63
    %p65 = scmp.ne.s32.totalorder %s53, %s54
    %p66 = scmp.eq.s32.totalorder %s23, 1
    %p67 = por %p65, %p66
    %p69 = scmp.ne.s32.totalorder %s54, %s68
    %p70 = scmp.eq.s32.totalorder %s23, 0
    %p71 = por %p69, %p70
    %s73 = sadd.s32 %s72, 1
    %p76 = scmp.eq.s32.totalorder %s17, 1
    %p77 = scmp.ne.s32.totalorder %s72, %s74
    %p78 = scmp.eq.s32.totalorder %s17, 0
    %p79 = por %p77, %p78
    %p80 = scmp.ne.s32.totalorder %s72, %s74
    %p81 = scmp.eq.s32.totalorder %s22, 1
    %p82 = por %p80, %p81
    %p83 = scmp.ne.s32.totalorder %s74, %s75
    %p84 = scmp.eq.s32.totalorder %s22, 0
    %p85 = por %p83, %p84
    %p86 = scmp.ne.s32.totalorder %s74, %s75
    %p87 = scmp.eq.s32.totalorder %s23, 1
    %p88 = por %p86, %p87
    %p90 = scmp.ne.s32.totalorder %s75, %s89
    %p91 = scmp.eq.s32.totalorder %s23, 0
    %p92 = por %p90, %p91
    %s94 = sadd.s32 %s93, 1
    %p97 = scmp.eq.s32.totalorder %s17, 1
    %p98 = scmp.ne.s32.totalorder %s93, %s95
    %p99 = scmp.eq.s32.totalorder %s17, 0
    %p100 = por %p98, %p99
    %p101 = scmp.ne.s32.totalorder %s93, %s95
    %p102 = scmp.eq.s32.totalorder %s22, 1
    %p103 = por %p101, %p102
    %p104 = scmp.ne.s32.totalorder %s95, %s96
    %p105 = scmp.eq.s32.totalorder %s22, 0
    %p106 = por %p104, %p105
    %p107 = scmp.ne.s32.totalorder %s95, %s96
    %p108 = scmp.eq.s32.totalorder %s23, 1
    %p109 = por %p107, %p108
    %p111 = scmp.ne.s32.totalorder %s96, %s110
    %p112 = scmp.eq.s32.totalorder %s23, 0
    %p113 = por %p111, %p112
    %s115 = sadd.s32 %s114, 1
    %p118 = scmp.eq.s32.totalorder %s17, 1
    %p119 = scmp.ne.s32.totalorder %s114, %s116
    %p120 = scmp.eq.s32.totalorder %s17, 0
    %p121 = por %p119, %p120
    %p122 = scmp.ne.s32.totalorder %s114, %s116
    %p123 = scmp.eq.s32.totalorder %s22, 1
    %p124 = por %p122, %p123
    %p125 = scmp.ne.s32.totalorder %s116, %s117
    %p126 = scmp.eq.s32.totalorder %s22, 0
    %p127 = por %p125, %p126
    %p128 = scmp.ne.s32.totalorder %s116, %s117
    %p129 = scmp.eq.s32.totalorder %s23, 1
    %p130 = por %p128, %p129
    %p132 = scmp.ne.s32.totalorder %s117, %s131
    %p133 = scmp.eq.s32.totalorder %s23, 0
    %p134 = por %p132, %p133
    %s136 = sadd.s32 %s135, 1
    %p139 = scmp.eq.s32.totalorder %s17, 1
    %p140 = scmp.ne.s32.totalorder %s135, %s137
    %p141 = scmp.eq.s32.totalorder %s17, 0
    %p142 = por %p140, %p141
    %p143 = scmp.ne.s32.totalorder %s135, %s137
    %p144 = scmp.eq.s32.totalorder %s22, 1
    %p145 = por %p143, %p144
    %p146 = scmp.ne.s32.totalorder %s137, %s138
    %p147 = scmp.eq.s32.totalorder %s22, 0
    %p148 = por %p146, %p147
    %p149 = scmp.ne.s32.totalorder %s137, %s138
    %p150 = scmp.eq.s32.totalorder %s23, 1
    %p151 = por %p149, %p150
    %p153 = scmp.ne.s32.totalorder %s138, %s152
    %p154 = scmp.eq.s32.totalorder %s23, 0
    %p155 = por %p153, %p154
    %s157 = sadd.s32 %s156, 1
    %p160 = scmp.eq.s32.totalorder %s17, 1
    %p161 = scmp.ne.s32.totalorder %s156, %s158
    %p162 = scmp.eq.s32.totalorder %s17, 0
    %p163 = por %p161, %p162
    %p164 = scmp.ne.s32.totalorder %s156, %s158
    %p165 = scmp.eq.s32.totalorder %s22, 1
    %p166 = por %p164, %p165
    %p167 = scmp.ne.s32.totalorder %s158, %s159
    %p168 = scmp.eq.s32.totalorder %s22, 0
    %p169 = por %p167, %p168
    %p170 = scmp.ne.s32.totalorder %s158, %s159
    %p171 = scmp.eq.s32.totalorder %s23, 1
    %p172 = por %p170, %p171
    %p174 = scmp.ne.s32.totalorder %s159, %s173
    %p175 = scmp.eq.s32.totalorder %s23, 0
    %p176 = por %p174, %p175
    %s178 = sadd.s32 %s177, 1
    %p181 = scmp.eq.s32.totalorder %s17, 1
    %p182 = scmp.ne.s32.totalorder %s177, %s179
    %p183 = scmp.eq.s32.totalorder %s17, 0
    %p184 = por %p182, %p183
    %p185 = scmp.ne.s32.totalorder %s177, %s179
    %p186 = scmp.eq.s32.totalorder %s22, 1
    %p187 = por %p185, %p186
    %p188 = scmp.ne.s32.totalorder %s179, %s180
    %p189 = scmp.eq.s32.totalorder %s22, 0
    %p190 = por %p188, %p189
    %p191 = scmp.ne.s32.totalorder %s179, %s180
    %p192 = scmp.eq.s32.totalorder %s23, 1
    %p193 = por %p191, %p192
    %p195 = scmp.ne.s32.totalorder %s180, %s194
    %p196 = scmp.eq.s32.totalorder %s23, 0
    %p197 = por %p195, %p196
    %s199 = sadd.s32 %s198, 1
    %p202 = scmp.eq.s32.totalorder %s17, 1
    %p203 = scmp.ne.s32.totalorder %s198, %s200
    %p204 = scmp.eq.s32.totalorder %s17, 0
    %p205 = por %p203, %p204
    %p206 = scmp.ne.s32.totalorder %s198, %s200
    %p207 = scmp.eq.s32.totalorder %s22, 1
    %p208 = por %p206, %p207
    %p209 = scmp.ne.s32.totalorder %s200, %s201
    %p210 = scmp.eq.s32.totalorder %s22, 0
    %p211 = por %p209, %p210
    %p212 = scmp.ne.s32.totalorder %s200, %s201
    %p213 = scmp.eq.s32.totalorder %s23, 1
    %p214 = por %p212, %p213
    %p216 = scmp.ne.s32.totalorder %s201, %s215
    %p217 = scmp.eq.s32.totalorder %s23, 0
    %p218 = por %p216, %p217
    %s220 = sadd.s32 %s219, 1
    %p223 = scmp.eq.s32.totalorder %s17, 1
    %p224 = scmp.ne.s32.totalorder %s219, %s221
    %p225 = scmp.eq.s32.totalorder %s17, 0
    %p226 = por %p224, %p225
    %p227 = scmp.ne.s32.totalorder %s219, %s221
    %p228 = scmp.eq.s32.totalorder %s22, 1
    %p229 = por %p227, %p228
    %p230 = scmp.ne.s32.totalorder %s221, %s222
    %p231 = scmp.eq.s32.totalorder %s22, 0
    %p232 = por %p230, %p231
    %p233 = scmp.ne.s32.totalorder %s221, %s222
    %p234 = scmp.eq.s32.totalorder %s23, 1
    %p235 = por %p233, %p234
    %p237 = scmp.ne.s32.totalorder %s222, %s236
    %p238 = scmp.eq.s32.totalorder %s23, 0
    %p239 = por %p237, %p238
    %s241 = sadd.s32 %s240, 1
    %p244 = scmp.eq.s32.totalorder %s17, 1
    %p245 = scmp.ne.s32.totalorder %s240, %s242
    %p246 = scmp.eq.s32.totalorder %s17, 0
    %p247 = por %p245, %p246
    %p248 = scmp.ne.s32.totalorder %s240, %s242
    %p249 = scmp.eq.s32.totalorder %s22, 1
    %p250 = por %p248, %p249
    %p251 = scmp.ne.s32.totalorder %s242, %s243
    %p252 = scmp.eq.s32.totalorder %s22, 0
    %p253 = por %p251, %p252
    %p254 = scmp.ne.s32.totalorder %s242, %s243
    %p255 = scmp.eq.s32.totalorder %s23, 1
    %p256 = por %p254, %p255
    %p258 = scmp.ne.s32.totalorder %s243, %s257
    %p259 = scmp.eq.s32.totalorder %s23, 0
    %p260 = por %p258, %p259
    %s261 = ssub.s32 %s17, %s24
    %p262 = scmp.eq.s32.totalorder %s261, 0
    %s264 = sadd.s32 %s263, 1
    %s265 = scalar_select %p262, %s263, %s264
    %p268 = pneg %p262
    %p269 = scmp.eq.s32.totalorder %s17, 1
    %p270 = por %p268, %p269
    %p271 = scmp.ne.s32.totalorder %s263, %s266
    %p272 = scmp.eq.s32.totalorder %s17, 0
    %p273 = por %p271, %p272
    %p274 = scmp.ne.s32.totalorder %s263, %s266
    %p275 = scmp.eq.s32.totalorder %s22, 1
    %p276 = por %p274, %p275
    %p277 = scmp.ne.s32.totalorder %s266, %s267
    %p278 = scmp.eq.s32.totalorder %s22, 0
    %p279 = por %p277, %p278
    %p280 = scmp.ne.s32.totalorder %s266, %s267
    %p281 = scmp.eq.s32.totalorder %s23, 1
    %p282 = por %p280, %p281
    %p284 = scmp.ne.s32.totalorder %s267, %s283
    %p285 = scmp.eq.s32.totalorder %s23, 0
    %p286 = por %p284, %p285
    %p287 = scmp.le.s32.totalorder 1, %s17
    %p288 = scmp.lt.s32.totalorder %s17, 3
    %p289 = pnand %p287, %p288
    %p290 = pneg %p289
    // Predicated region
    $region9: #{backtrack_fc_forward.1} parent=5 // pred_check
      _
    $region10: #{backtrack_fc_forward.1} parent=5 // pred_check_branch
      %292 = sbr.rel (%p289) target = $region12
    $region11: #{backtrack_fc_forward.1} parent=5 // pred_region
      %s293 = ssub.s32 %s17, 1
      // Predicated region
      $region13: #{backtrack_fc_forward.1} parent=11 // pred_check
        %p294 = pneg %p64
      $region14: #{backtrack_fc_forward.1} parent=11 // pred_check_branch
        %296 = sbr.rel (%p294) target = $region16
      $region15: #{backtrack_fc_forward.1} parent=11 // pred_region
        _
      $region16: #{backtrack_fc_forward.1} parent=11 // pred_fallthru
        _
      // Predicated region
      $region17: #{backtrack_fc_forward.1} parent=11 // pred_check
        %p297 = pneg %p85
      $region18: #{backtrack_fc_forward.1} parent=11 // pred_check_branch
        %299 = sbr.rel (%p297) target = $region20
      $region19: #{backtrack_fc_forward.1} parent=11 // pred_region
        _
      $region20: #{backtrack_fc_forward.1} parent=11 // pred_fallthru
        _
      // Predicated region
      $region21: #{backtrack_fc_forward.1} parent=11 // pred_check
        %p300 = pneg %p106
      $region22: #{backtrack_fc_forward.1} parent=11 // pred_check_branch
        %302 = sbr.rel (%p300) target = $region24
      $region23: #{backtrack_fc_forward.1} parent=11 // pred_region
        _
      $region24: #{backtrack_fc_forward.1} parent=11 // pred_fallthru
        _
      // Predicated region
      $region25: #{backtrack_fc_forward.1} parent=11 // pred_check
        %p303 = pneg %p127
      $region26: #{backtrack_fc_forward.1} parent=11 // pred_check_branch
        %305 = sbr.rel (%p303) target = $region28
      $region27: #{backtrack_fc_forward.1} parent=11 // pred_region
        _
      $region28: #{backtrack_fc_forward.1} parent=11 // pred_fallthru
        _
      // Predicated region
      $region29: #{backtrack_fc_forward.1} parent=11 // pred_check
        %p306 = pneg %p148
      $region30: #{backtrack_fc_forward.1} parent=11 // pred_check_branch
        %308 = sbr.rel (%p306) target = $region32
      $region31: #{backtrack_fc_forward.1} parent=11 // pred_region
        _
      $region32: #{backtrack_fc_forward.1} parent=11 // pred_fallthru
        _
      // Predicated region
      $region33: #{backtrack_fc_forward.1} parent=11 // pred_check
        %p309 = pneg %p169
      $region34: #{backtrack_fc_forward.1} parent=11 // pred_check_branch
        %311 = sbr.rel (%p309) target = $region36
      $region35: #{backtrack_fc_forward.1} parent=11 // pred_region
        _
      $region36: #{backtrack_fc_forward.1} parent=11 // pred_fallthru
        _
      // Predicated region
      $region37: #{backtrack_fc_forward.1} parent=11 // pred_check
        %p312 = pneg %p190
      $region38: #{backtrack_fc_forward.1} parent=11 // pred_check_branch
        %314 = sbr.rel (%p312) target = $region40
      $region39: #{backtrack_fc_forward.1} parent=11 // pred_region
        _
      $region40: #{backtrack_fc_forward.1} parent=11 // pred_fallthru
        _
      // Predicated region
      $region41: #{backtrack_fc_forward.1} parent=11 // pred_check
        %p315 = pneg %p211
      $region42: #{backtrack_fc_forward.1} parent=11 // pred_check_branch
        %317 = sbr.rel (%p315) target = $region44
      $region43: #{backtrack_fc_forward.1} parent=11 // pred_region
        _
      $region44: #{backtrack_fc_forward.1} parent=11 // pred_fallthru
        _
      // Predicated region
      $region45: #{backtrack_fc_forward.1} parent=11 // pred_check
        %p318 = pneg %p232
      $region46: #{backtrack_fc_forward.1} parent=11 // pred_check_branch
        %320 = sbr.rel (%p318) target = $region48
      $region47: #{backtrack_fc_forward.1} parent=11 // pred_region
        _
      $region48: #{backtrack_fc_forward.1} parent=11 // pred_fallthru
        _
      // Predicated region
      $region49: #{backtrack_fc_forward.1} parent=11 // pred_check
        %p321 = pneg %p253
      $region50: #{backtrack_fc_forward.1} parent=11 // pred_check_branch
        %323 = sbr.rel (%p321) target = $region52
      $region51: #{backtrack_fc_forward.1} parent=11 // pred_region
        _
      $region52: #{backtrack_fc_forward.1} parent=11 // pred_fallthru
        _
    $region12: #{backtrack_fc_forward.1} parent=5 // pred_fallthru
      _
    %p324 = scmp.lt.s32.totalorder %s17, 2
    // Predicated region
    $region53: #{backtrack_fc_forward.1} parent=5 // pred_check
      %p325 = pneg %p324
    $region54: #{backtrack_fc_forward.1} parent=5 // pred_check_branch
      %327 = sbr.rel (%p325) target = $region56
    $region55: #{backtrack_fc_forward.1} parent=5 // pred_region
      // Predicated region
      $region57: #{backtrack_fc_forward.1} parent=55 // pred_check
        %p328 = pneg %p37
      $region58: #{backtrack_fc_forward.1} parent=55 // pred_check_branch
        %330 = sbr.rel (%p328) target = $region60
      $region59: #{backtrack_fc_forward.1} parent=55 // pred_region
        %p331 = scmp.lt.s32.totalorder %s17, 1
        %s332 = scalar_select %p331, %s17, 1
        %s333 = smul.addr %s332, 8
        %s334 = scalar_lea.vmem %s0, %s333
      $region60: #{backtrack_fc_forward.1} parent=55 // pred_fallthru
        _
    $region56: #{backtrack_fc_forward.1} parent=5 // pred_fallthru
      _
    %p335 = scmp.le.s32.totalorder 1, %s17
    %p336 = scmp.lt.s32.totalorder %s17, 3
    %p337 = pnand %p335, %p336
    %p338 = pneg %p337
    // Predicated region
    $region61: #{backtrack_fc_forward.1} parent=5 // pred_check
      _
    $region62: #{backtrack_fc_forward.1} parent=5 // pred_check_branch
      %340 = sbr.rel (%p337) target = $region64
    $region63: #{backtrack_fc_forward.1} parent=5 // pred_region
      %s341 = ssub.s32 %s17, 1
      %p342 = scmp.lt.s32.totalorder %s22, 1
      %s343 = scalar_select %p342, %s22, 1
      %s344 = smul.addr %s343, 8
      %s345 = scalar_lea.vmem %s0, %s344
      %p346 = pneg %p43
      %p347 = pneg %p40
      %p348 = pneg %p64
      %p349 = pneg %p61
      %p350 = pneg %p85
      %p351 = pneg %p82
      %p352 = pneg %p106
      %p353 = pneg %p103
      %p354 = pneg %p127
      %p355 = pneg %p124
      %p356 = pneg %p148
      %p357 = pneg %p145
      %p358 = pneg %p169
      %p359 = pneg %p166
      %p360 = pneg %p190
      %p361 = pneg %p187
      %p362 = pneg %p211
      %p363 = pneg %p208
      %p364 = pneg %p232
      %p365 = pneg %p229
      %p366 = pneg %p253
      %p367 = pneg %p250
      %p368 = pneg %p279
      %p369 = pneg %p276
      %p370 = scmp.lt.s32.totalorder %s22, 1
      %s371 = scalar_select %p370, %s22, 1
      %s372 = smul.addr %s371, 8
      %s373 = scalar_lea.vmem %s11, %s372
      %p374 = scmp.lt.s32.totalorder %s22, 1
      %s375 = scalar_select %p374, %s22, 1
      %s376 = smul.addr %s375, 8
      %s377 = scalar_lea.vmem %s0, %s376
      %p378 = scmp.lt.s32.totalorder %s22, 1
      %s379 = scalar_select %p378, %s22, 1
      %s380 = smul.addr %s379, 8
      %s381 = scalar_lea.vmem %s11, %s380
      %v382 = vld [vmem:[%s377] sm:$0xff]
      %v383 = vld [vmem:[%s1] sm:$0xff]
      %v384 = vld [vmem:[%s1 + $0x8] sm:$0xff]
      %v385 = vld [vmem:[%s1 + $0x10] sm:$0xff]
      %v386 = vld [vmem:[%s1 + $0x18] sm:$0xff]
      %v387 = vld [vmem:[%s2] sm:$0x1]
      %v389 = vlaneseq
      %v390 = vshrl.u32 %v389, 7
      %v391 = vsub.s32 0, %v390
      %v392 = vrot.slane %v387, %v391
      %vm394 = vcmask 261120
      %v396 = vsel %vm394, %v382, 0
      %398 = vmatprep.subr.mxu0 0.0
      %399 = vmatpush1.msra.mxu0 %v383
      %400 = vmatprep.subr.mxu0 0.0
      %401 = vmatpush1.msra.mxu0 %v384
      %402 = vmatprep.subr.mxu0 0.0
      %403 = vmatpush1.msra.mxu0 %v385
      %404 = vmatprep.subr.mxu0 0.0
      %405 = vmatpush1.msra.mxu0 %v386
      %406 = vmatprep.subr.mxu0 0.0
      %407 = vmatpush1.msra.mxu0 0.0
      %408 = vmatprep.subr.mxu0 0.0
      %409 = vmatpush1.msra.mxu0 0.0
      %410 = vmatprep.subr.mxu0 0.0
      %411 = vmatpush1.msra.mxu0 0.0
      %412 = vmatprep.subr.mxu0 0.0
      %413 = vmatpush1.msra.mxu0 0.0
      %414 = vmatprep.subr.mxu0 0.0
      %415 = vmatpush1.msra.mxu0 0.0
      %416 = vmatprep.subr.mxu0 0.0
      %417 = vmatpush1.msra.mxu0 0.0
      %418 = vmatprep.subr.mxu0 0.0
      %419 = vmatpush1.msra.mxu0 0.0
      %420 = vmatprep.subr.mxu0 0.0
      %421 = vmatpush1.msra.mxu0 0.0
      %422 = vmatprep.subr.mxu0 0.0
      %423 = vmatpush1.msra.mxu0 0.0
      %424 = vmatprep.subr.mxu0 0.0
      %425 = vmatpush1.msra.mxu0 0.0
      %426 = vmatprep.subr.mxu0 0.0
      %427 = vmatpush1.msra.mxu0 0.0
      %428 = vmatprep.subr.mxu0 0.0
      %429 = vmatpush1.msra.mxu0 0.0
      %430 = vmatprep.subr.mxu0 0.0
      %431 = vmatpush1.msra.mxu0 0.0
      %432 = vmatprep.subr.mxu0 0.0
      %433 = vmatpush1.msra.mxu0 0.0
      %434 = vmatprep.subr.mxu0 0.0
      %435 = vmatpush1.msra.mxu0 0.0
      %436 = vmatprep.subr.mxu0 0.0
      %437 = vmatpush1.msra.mxu0 0.0
      %438 = vmatprep.subr.mxu0 0.0
      %439 = vmatpush1.msra.mxu0 0.0
      %440 = vmatprep.subr.mxu0 0.0
      %441 = vmatpush1.msra.mxu0 0.0
      %442 = vmatprep.subr.mxu0 0.0
      %443 = vmatpush1.msra.mxu0 0.0
      %444 = vmatprep.subr.mxu0 0.0
      %445 = vmatpush1.msra.mxu0 0.0
      %446 = vmatprep.subr.mxu0 0.0
      %447 = vmatpush1.msra.mxu0 0.0
      %448 = vmatprep.subr.mxu0 0.0
      %449 = vmatpush1.msra.mxu0 0.0
      %450 = vmatprep.subr.mxu0 0.0
      %451 = vmatpush1.msra.mxu0 0.0
      %452 = vmatprep.subr.mxu0 0.0
      %453 = vmatpush1.msra.mxu0 0.0
      %454 = vmatprep.subr.mxu0 0.0
      %455 = vmatpush1.msra.mxu0 0.0
      %456 = vmatprep.subr.mxu0 0.0
      %457 = vmatpush1.msra.mxu0 0.0
      %458 = vmatprep.subr.mxu0 0.0
      %459 = vmatpush1.msra.mxu0 0.0
      %460 = vmatprep.subr.mxu0 0.0
      %461 = vmatpush1.msra.mxu0 0.0
      %462 = vmatprep.mubr.f32.mxu0 0.0
      %463 = vmatmul.mubr.f32.gmra.mrb[0].mxu0 %v396
      %v464 = vpop.f32.mrb[0].mxu0
      %v465 = vadd.f32 %v392, %v464
      %v466 = vpop.f32.mrb[0].mxu0
      %467 = vdwg.mxu0
      %v468 = vmax.f32 %v465, 0.0
      %v469 = vld [vmem:[%s3] sm:$0xff]
      %v470 = vld [vmem:[%s3 + $0x8] sm:$0xff]
      %v471 = vld [vmem:[%s3 + $0x10] sm:$0xff]
      %v472 = vld [vmem:[%s3 + $0x18] sm:$0xff]
      %v473 = vld [vmem:[%s3 + $0x20] sm:$0xff]
      %v474 = vld [vmem:[%s3 + $0x28] sm:$0xff]
      %v475 = vld [vmem:[%s3 + $0x30] sm:$0xff]
      %v476 = vld [vmem:[%s3 + $0x38] sm:$0xf]
      %v477 = vld [vmem:[%s4] sm:$0x1]
      %v479 = vlaneseq
      %v480 = vshrl.u32 %v479, 7
      %v481 = vsub.s32 0, %v480
      %v482 = vrot.slane %v477, %v481
      %vm484 = vcmask 490496
      %v486 = vsel %vm484, %v468, 0
      %vm488 = vcmask 1043456
      %v490 = vsel %vm488, %v476, 0
      %492 = vmatprep.subr.mxu0 0.0
      %493 = vmatpush1.msra.mxu0 %v469
      %494 = vmatprep.subr.mxu0 0.0
      %495 = vmatpush1.msra.mxu0 %v470
      %496 = vmatprep.subr.mxu0 0.0
      %497 = vmatpush1.msra.mxu0 %v471
      %498 = vmatprep.subr.mxu0 0.0
      %499 = vmatpush1.msra.mxu0 %v472
      %500 = vmatprep.subr.mxu0 0.0
      %501 = vmatpush1.msra.mxu0 %v473
      %502 = vmatprep.subr.mxu0 0.0
      %503 = vmatpush1.msra.mxu0 %v474
      %504 = vmatprep.subr.mxu0 0.0
      %505 = vmatpush1.msra.mxu0 %v475
      %506 = vmatprep.subr.mxu0 0.0
      %507 = vmatpush1.msra.mxu0 %v490
      %508 = vmatprep.subr.mxu0 0.0
      %509 = vmatpush1.msra.mxu0 0.0
      %510 = vmatprep.subr.mxu0 0.0
      %511 = vmatpush1.msra.mxu0 0.0
      %512 = vmatprep.subr.mxu0 0.0
      %513 = vmatpush1.msra.mxu0 0.0
      %514 = vmatprep.subr.mxu0 0.0
      %515 = vmatpush1.msra.mxu0 0.0
      %516 = vmatprep.subr.mxu0 0.0
      %517 = vmatpush1.msra.mxu0 0.0
      %518 = vmatprep.subr.mxu0 0.0
      %519 = vmatpush1.msra.mxu0 0.0
      %520 = vmatprep.subr.mxu0 0.0
      %521 = vmatpush1.msra.mxu0 0.0
      %522 = vmatprep.subr.mxu0 0.0
      %523 = vmatpush1.msra.mxu0 0.0
      %524 = vmatprep.subr.mxu0 0.0
      %525 = vmatpush1.msra.mxu0 0.0
      %526 = vmatprep.subr.mxu0 0.0
      %527 = vmatpush1.msra.mxu0 0.0
      %528 = vmatprep.subr.mxu0 0.0
      %529 = vmatpush1.msra.mxu0 0.0
      %530 = vmatprep.subr.mxu0 0.0
      %531 = vmatpush1.msra.mxu0 0.0
      %532 = vmatprep.subr.mxu0 0.0
      %533 = vmatpush1.msra.mxu0 0.0
      %534 = vmatprep.subr.mxu0 0.0
      %535 = vmatpush1.msra.mxu0 0.0
      %536 = vmatprep.subr.mxu0 0.0
      %537 = vmatpush1.msra.mxu0 0.0
      %538 = vmatprep.subr.mxu0 0.0
      %539 = vmatpush1.msra.mxu0 0.0
      %540 = vmatprep.subr.mxu0 0.0
      %541 = vmatpush1.msra.mxu0 0.0
      %542 = vmatprep.subr.mxu0 0.0
      %543 = vmatpush1.msra.mxu0 0.0
      %544 = vmatprep.subr.mxu0 0.0
      %545 = vmatpush1.msra.mxu0 0.0
      %546 = vmatprep.subr.mxu0 0.0
      %547 = vmatpush1.msra.mxu0 0.0
      %548 = vmatprep.subr.mxu0 0.0
      %549 = vmatpush1.msra.mxu0 0.0
      %550 = vmatprep.subr.mxu0 0.0
      %551 = vmatpush1.msra.mxu0 0.0
      %552 = vmatprep.subr.mxu0 0.0
      %553 = vmatpush1.msra.mxu0 0.0
      %554 = vmatprep.subr.mxu0 0.0
      %555 = vmatpush1.msra.mxu0 0.0
      %556 = vmatprep.mubr.f32.mxu0 0.0
      %557 = vmatmul.mubr.f32.gmra.mrb[0].mxu0 %v486
      %v558 = vpop.f32.mrb[0].mxu0
      %v559 = vadd.f32 %v482, %v558
      %v560 = vpop.f32.mrb[0].mxu0
      %561 = vdwg.mxu0
      %v562 = vmax.f32 %v559, 0.0
      %v563 = vld [vmem:[%s5] sm:$0xff]
      %v564 = vld [vmem:[%s5 + $0x8] sm:$0xff]
      %v565 = vld [vmem:[%s5 + $0x10] sm:$0xff]
      %v566 = vld [vmem:[%s5 + $0x18] sm:$0x3f]
      %v567 = vld [vmem:[%s6] sm:$0x1]
      %v569 = vlaneseq
      %v570 = vshrl.u32 %v569, 7
      %v571 = vsub.s32 0, %v570
      %v572 = vrot.slane %v567, %v571
      %vm574 = vcmask 244736
      %v576 = vsel %vm574, %v562, 0
      %vm578 = vcmask 1045504
      %v580 = vsel %vm578, %v566, 0
      %582 = vmatprep.subr.mxu0 0.0
      %583 = vmatpush1.msra.mxu0 %v563
      %584 = vmatprep.subr.mxu0 0.0
      %585 = vmatpush1.msra.mxu0 %v564
      %586 = vmatprep.subr.mxu0 0.0
      %587 = vmatpush1.msra.mxu0 %v565
      %588 = vmatprep.subr.mxu0 0.0
      %589 = vmatpush1.msra.mxu0 %v580
      %590 = vmatprep.subr.mxu0 0.0
      %591 = vmatpush1.msra.mxu0 0.0
      %592 = vmatprep.subr.mxu0 0.0
      %593 = vmatpush1.msra.mxu0 0.0
      %594 = vmatprep.subr.mxu0 0.0
      %595 = vmatpush1.msra.mxu0 0.0
      %596 = vmatprep.subr.mxu0 0.0
      %597 = vmatpush1.msra.mxu0 0.0
      %598 = vmatprep.subr.mxu0 0.0
      %599 = vmatpush1.msra.mxu0 0.0
      %600 = vmatprep.subr.mxu0 0.0
      %601 = vmatpush1.msra.mxu0 0.0
      %602 = vmatprep.subr.mxu0 0.0
      %603 = vmatpush1.msra.mxu0 0.0
      %604 = vmatprep.subr.mxu0 0.0
      %605 = vmatpush1.msra.mxu0 0.0
      %606 = vmatprep.subr.mxu0 0.0
      %607 = vmatpush1.msra.mxu0 0.0
      %608 = vmatprep.subr.mxu0 0.0
      %609 = vmatpush1.msra.mxu0 0.0
      %610 = vmatprep.subr.mxu0 0.0
      %611 = vmatpush1.msra.mxu0 0.0
      %612 = vmatprep.subr.mxu0 0.0
      %613 = vmatpush1.msra.mxu0 0.0
      %614 = vmatprep.subr.mxu0 0.0
      %615 = vmatpush1.msra.mxu0 0.0
      %616 = vmatprep.subr.mxu0 0.0
      %617 = vmatpush1.msra.mxu0 0.0
      %618 = vmatprep.subr.mxu0 0.0
      %619 = vmatpush1.msra.mxu0 0.0
      %620 = vmatprep.subr.mxu0 0.0
      %621 = vmatpush1.msra.mxu0 0.0
      %622 = vmatprep.subr.mxu0 0.0
      %623 = vmatpush1.msra.mxu0 0.0
      %624 = vmatprep.subr.mxu0 0.0
      %625 = vmatpush1.msra.mxu0 0.0
      %626 = vmatprep.subr.mxu0 0.0
      %627 = vmatpush1.msra.mxu0 0.0
      %628 = vmatprep.subr.mxu0 0.0
      %629 = vmatpush1.msra.mxu0 0.0
      %630 = vmatprep.subr.mxu0 0.0
      %631 = vmatpush1.msra.mxu0 0.0
      %632 = vmatprep.subr.mxu0 0.0
      %633 = vmatpush1.msra.mxu0 0.0
      %634 = vmatprep.subr.mxu0 0.0
      %635 = vmatpush1.msra.mxu0 0.0
      %636 = vmatprep.subr.mxu0 0.0
      %637 = vmatpush1.msra.mxu0 0.0
      %638 = vmatprep.subr.mxu0 0.0
      %639 = vmatpush1.msra.mxu0 0.0
      %640 = vmatprep.subr.mxu0 0.0
      %641 = vmatpush1.msra.mxu0 0.0
      %642 = vmatprep.subr.mxu0 0.0
      %643 = vmatpush1.msra.mxu0 0.0
      %644 = vmatprep.subr.mxu0 0.0
      %645 = vmatpush1.msra.mxu0 0.0
      %646 = vmatprep.mubr.f32.mxu0 0.0
      %647 = vmatmul.mubr.f32.gmra.mrb[0].mxu0 %v576
      %v648 = vpop.f32.mrb[0].mxu0
      %v649 = vadd.f32 %v572, %v648
      %v650 = vpop.f32.mrb[0].mxu0
      %651 = vdwg.mxu0
      %v652 = vmax.f32 %v649, 0.0
      %v653 = vld [vmem:[%s7] sm:$0xff]
      %v654 = vld [vmem:[%s7 + $0x8] sm:$0x7f]
      %v655 = vld [vmem:[%s8] sm:$0x1]
      %v657 = vlaneseq
      %v658 = vshrl.u32 %v657, 7
      %v659 = vsub.s32 0, %v658
      %v660 = vrot.slane %v655, %v659
      %vm662 = vcmask 121856
      %v664 = vsel %vm662, %v652, 0
      %vm666 = vcmask 1046528
      %v668 = vsel %vm666, %v654, 0
      %670 = vmatprep.subr.mxu0 0.0
      %671 = vmatpush1.msra.mxu0 %v653
      %672 = vmatprep.subr.mxu0 0.0
      %673 = vmatpush1.msra.mxu0 %v668
      %674 = vmatprep.subr.mxu0 0.0
      %675 = vmatpush1.msra.mxu0 0.0
      %676 = vmatprep.subr.mxu0 0.0
      %677 = vmatpush1.msra.mxu0 0.0
      %678 = vmatprep.subr.mxu0 0.0
      %679 = vmatpush1.msra.mxu0 0.0
      %680 = vmatprep.subr.mxu0 0.0
      %681 = vmatpush1.msra.mxu0 0.0
      %682 = vmatprep.subr.mxu0 0.0
      %683 = vmatpush1.msra.mxu0 0.0
      %684 = vmatprep.subr.mxu0 0.0
      %685 = vmatpush1.msra.mxu0 0.0
      %686 = vmatprep.subr.mxu0 0.0
      %687 = vmatpush1.msra.mxu0 0.0
      %688 = vmatprep.subr.mxu0 0.0
      %689 = vmatpush1.msra.mxu0 0.0
      %690 = vmatprep.subr.mxu0 0.0
      %691 = vmatpush1.msra.mxu0 0.0
      %692 = vmatprep.subr.mxu0 0.0
      %693 = vmatpush1.msra.mxu0 0.0
      %694 = vmatprep.subr.mxu0 0.0
      %695 = vmatpush1.msra.mxu0 0.0
      %696 = vmatprep.subr.mxu0 0.0
      %697 = vmatpush1.msra.mxu0 0.0
      %698 = vmatprep.subr.mxu0 0.0
      %699 = vmatpush1.msra.mxu0 0.0
      %700 = vmatprep.subr.mxu0 0.0
      %701 = vmatpush1.msra.mxu0 0.0
      %702 = vmatprep.subr.mxu0 0.0
      %703 = vmatpush1.msra.mxu0 0.0
      %704 = vmatprep.subr.mxu0 0.0
      %705 = vmatpush1.msra.mxu0 0.0
      %706 = vmatprep.subr.mxu0 0.0
      %707 = vmatpush1.msra.mxu0 0.0
      %708 = vmatprep.subr.mxu0 0.0
      %709 = vmatpush1.msra.mxu0 0.0
      %710 = vmatprep.subr.mxu0 0.0
      %711 = vmatpush1.msra.mxu0 0.0
      %712 = vmatprep.subr.mxu0 0.0
      %713 = vmatpush1.msra.mxu0 0.0
      %714 = vmatprep.subr.mxu0 0.0
      %715 = vmatpush1.msra.mxu0 0.0
      %716 = vmatprep.subr.mxu0 0.0
      %717 = vmatpush1.msra.mxu0 0.0
      %718 = vmatprep.subr.mxu0 0.0
      %719 = vmatpush1.msra.mxu0 0.0
      %720 = vmatprep.subr.mxu0 0.0
      %721 = vmatpush1.msra.mxu0 0.0
      %722 = vmatprep.subr.mxu0 0.0
      %723 = vmatpush1.msra.mxu0 0.0
      %724 = vmatprep.subr.mxu0 0.0
      %725 = vmatpush1.msra.mxu0 0.0
      %726 = vmatprep.subr.mxu0 0.0
      %727 = vmatpush1.msra.mxu0 0.0
      %728 = vmatprep.subr.mxu0 0.0
      %729 = vmatpush1.msra.mxu0 0.0
      %730 = vmatprep.subr.mxu0 0.0
      %731 = vmatpush1.msra.mxu0 0.0
      %732 = vmatprep.subr.mxu0 0.0
      %733 = vmatpush1.msra.mxu0 0.0
      %734 = vmatprep.mubr.f32.mxu0 0.0
      %735 = vmatmul.mubr.f32.gmra.mrb[0].mxu0 %v664
      %v736 = vpop.f32.mrb[0].mxu0
      %v737 = vadd.f32 %v660, %v736
      %v738 = vpop.f32.mrb[0].mxu0
      %739 = vdwg.mxu0
      %v740 = vmax.f32 %v737, 0.0
      %v741 = vld [vmem:[%s9] sm:$0x1f]
      %v742 = vld [vmem:[%s10] sm:$0x1]
      %v744 = vlaneseq
      %v745 = vshrl.u32 %v744, 7
      %v746 = vsub.s32 0, %v745
      %v747 = vrot.slane %v742, %v746
      %vm749 = vcmask 39936
      %v751 = vsel %vm749, %v740, 0
      %vm753 = vcmask 1044480
      %v755 = vsel %vm753, %v741, 0
      %757 = vmatprep.subr.mxu0 0.0
      %758 = vmatpush1.msra.mxu0 %v755
      %759 = vmatprep.subr.mxu0 0.0
      %760 = vmatpush1.msra.mxu0 0.0
      %761 = vmatprep.subr.mxu0 0.0
      %762 = vmatpush1.msra.mxu0 0.0
      %763 = vmatprep.subr.mxu0 0.0
      %764 = vmatpush1.msra.mxu0 0.0
      %765 = vmatprep.subr.mxu0 0.0
      %766 = vmatpush1.msra.mxu0 0.0
      %767 = vmatprep.subr.mxu0 0.0
      %768 = vmatpush1.msra.mxu0 0.0
      %769 = vmatprep.subr.mxu0 0.0
      %770 = vmatpush1.msra.mxu0 0.0
      %771 = vmatprep.subr.mxu0 0.0
      %772 = vmatpush1.msra.mxu0 0.0
      %773 = vmatprep.subr.mxu0 0.0
      %774 = vmatpush1.msra.mxu0 0.0
      %775 = vmatprep.subr.mxu0 0.0
      %776 = vmatpush1.msra.mxu0 0.0
      %777 = vmatprep.subr.mxu0 0.0
      %778 = vmatpush1.msra.mxu0 0.0
      %779 = vmatprep.subr.mxu0 0.0
      %780 = vmatpush1.msra.mxu0 0.0
      %781 = vmatprep.subr.mxu0 0.0
      %782 = vmatpush1.msra.mxu0 0.0
      %783 = vmatprep.subr.mxu0 0.0
      %784 = vmatpush1.msra.mxu0 0.0
      %785 = vmatprep.subr.mxu0 0.0
      %786 = vmatpush1.msra.mxu0 0.0
      %787 = vmatprep.subr.mxu0 0.0
      %788 = vmatpush1.msra.mxu0 0.0
      %789 = vmatprep.subr.mxu0 0.0
      %790 = vmatpush1.msra.mxu0 0.0
      %791 = vmatprep.subr.mxu0 0.0
      %792 = vmatpush1.msra.mxu0 0.0
      %793 = vmatprep.subr.mxu0 0.0
      %794 = vmatpush1.msra.mxu0 0.0
      %795 = vmatprep.subr.mxu0 0.0
      %796 = vmatpush1.msra.mxu0 0.0
      %797 = vmatprep.subr.mxu0 0.0
      %798 = vmatpush1.msra.mxu0 0.0
      %799 = vmatprep.subr.mxu0 0.0
      %800 = vmatpush1.msra.mxu0 0.0
      %801 = vmatprep.subr.mxu0 0.0
      %802 = vmatpush1.msra.mxu0 0.0
      %803 = vmatprep.subr.mxu0 0.0
      %804 = vmatpush1.msra.mxu0 0.0
      %805 = vmatprep.subr.mxu0 0.0
      %806 = vmatpush1.msra.mxu0 0.0
      %807 = vmatprep.subr.mxu0 0.0
      %808 = vmatpush1.msra.mxu0 0.0
      %809 = vmatprep.subr.mxu0 0.0
      %810 = vmatpush1.msra.mxu0 0.0
      %811 = vmatprep.subr.mxu0 0.0
      %812 = vmatpush1.msra.mxu0 0.0
      %813 = vmatprep.subr.mxu0 0.0
      %814 = vmatpush1.msra.mxu0 0.0
      %815 = vmatprep.subr.mxu0 0.0
      %816 = vmatpush1.msra.mxu0 0.0
      %817 = vmatprep.subr.mxu0 0.0
      %818 = vmatpush1.msra.mxu0 0.0
      %819 = vmatprep.subr.mxu0 0.0
      %820 = vmatpush1.msra.mxu0 0.0
      %821 = vmatprep.mubr.f32.mxu0 0.0
      %822 = vmatmul.mubr.f32.gmra.mrb[0].mxu0 %v751
      %v823 = vpop.f32.mrb[0].mxu0
      %v824 = vadd.f32 %v747, %v823
      %v825 = vpop.f32.mrb[0].mxu0
      %826 = vdwg.mxu0
      %v827 = vsub.f32 0.0, %v824
      %v828 = vmul.f32 %v827, 1.442695
      %v829 = vpow.pop %v828
      %v830 = vadd.f32 %v829, 1.0
      %v831 = vrcp.pop %v830
      %vm832 = vcmask 31744
      %833 = vst.msk [vmem:[%s381] sm:$0xff] %vm832, %v831
      %p834 = scmp.lt.s32.totalorder %s22, 1
      %s835 = scalar_select %p834, %s22, 1
      %s836 = smul.addr %s835, 8
      %s837 = scalar_lea.vmem %s11, %s836
      // Predicated region
      $region65: #{backtrack_fc_forward.1} parent=63 // pred_check
        %p838 = pneg %p276
      $region66: #{backtrack_fc_forward.1} parent=63 // pred_check_branch
        %840 = sbr.rel (%p838) target = $region68
      $region67: #{backtrack_fc_forward.1} parent=63 // pred_region
        _
      $region68: #{backtrack_fc_forward.1} parent=63 // pred_fallthru
        _
    $region64: #{backtrack_fc_forward.1} parent=5 // pred_fallthru
      _
    %p841 = scmp.le.s32.totalorder 2, %s17
    // Predicated region
    $region69: #{backtrack_fc_forward.1} parent=5 // pred_check
      %p842 = pneg %p841
    $region70: #{backtrack_fc_forward.1} parent=5 // pred_check_branch
      %844 = sbr.rel (%p842) target = $region72
    $region71: #{backtrack_fc_forward.1} parent=5 // pred_region
      %s845 = ssub.s32 %s17, 2
      // Predicated region
      $region73: #{backtrack_fc_forward.1} parent=71 // pred_check
        %p846 = pneg %p282
      $region74: #{backtrack_fc_forward.1} parent=71 // pred_check_branch
        %848 = sbr.rel (%p846) target = $region76
      $region75: #{backtrack_fc_forward.1} parent=71 // pred_region
        %p849 = scmp.lt.s32.totalorder %s23, 1
        %s850 = scalar_select %p849, %s23, 1
        %s851 = smul.addr %s850, 8
        %s852 = scalar_lea.vmem %s11, %s851
      $region76: #{backtrack_fc_forward.1} parent=71 // pred_fallthru
        _
    $region72: #{backtrack_fc_forward.1} parent=5 // pred_fallthru
      _
  $region6: #{backtrack_fc_forward.1} parent=0 // loop_footer
    %s21 = sadd.s32 1, %s17
  $region7: #{backtrack_fc_forward.1} parent=0 // loop_footer_branch
    %16 = sbr.rel target = $region3
  $region8: #{backtrack_fc_forward.1} parent=0 // loop_exit
    _

</llo_original>
